<compile_context>
chip_gen: v7x
topology: tpu7x:2x2x1
jax: 0.10.0
libtpu: 0.0.40
codegen_flags: <defaults>
</compile_context>

<pallas_src>
import functools

import jax
import jax.numpy as jnp
import numpy as np
from jax import lax
from jax.experimental import pallas as pl
from jax.experimental.pallas import tpu as pltpu


# ----------------------------- Pallas kernel --------------------------------
def fits_kernel(x_ref, m_ref, b_ref, o_ref, *, inv_n_minus_1):
    # Normalization math stays in f32 (v5e VPU/EUP have no native bf16).
    x = x_ref[...].astype(jnp.float32)                     # (TB, L)

    mean = jnp.mean(x, axis=1, keepdims=True)              # (TB, 1)
    xc = x - mean
    var = jnp.sum(xc * xc, axis=1, keepdims=True) * inv_n_minus_1 + 1e-5
    inv_std = lax.rsqrt(var)                               # EUP rsqrt: no sqrt+div pair
    std = var * inv_std                                    # == sqrt(var)
    xn = xc * inv_std                                      # (TB, L) f32

    # Fused (rfft -> complex linear -> zero-pad -> irfft -> *length_ratio) as
    # ONE matmul.  Weights stored in bf16 -> single bf16 MXU pass, f32 acc.
    y = jnp.dot(xn.astype(m_ref.dtype), m_ref[...],
                preferred_element_type=jnp.float32) + b_ref[...]

    # De-normalize and store in the (possibly bf16) output dtype: the output
    # write is the dominant HBM stream, so keep it narrow.
    o_ref[...] = (y * std + mean).astype(o_ref.dtype)


# ------------------- offline precompose of the linear chain ------------------
def make_fits_weights(Wr, Wi, br, bi, *, input_len, out_len, cut_freq,
                      weight_dtype=jnp.bfloat16):
    """Fold rfft -> complex Linear -> zero-pad -> irfft -> *length_ratio into (M, b).

    Returns M (input_len, out_pad) in `weight_dtype` and b (1, out_pad) in f32,
    where out_pad = out_len rounded up to a multiple of 128 (lane-dense output;
    the wrapper slices back to out_len).  Built once on the host in float64.
    """
    # torch.fft.irfft with default n gives 2*(out_len//2) samples; the module
    # relies on that equalling out_len, which requires even out_len.
    assert out_len % 2 == 0, "FITS module semantics require even out_len"

    Wr = np.asarray(Wr, np.float64)
    Wi = np.asarray(Wi, np.float64)
    br = np.asarray(br, np.float64)
    bi = np.asarray(bi, np.float64)

    length_ratio = out_len / input_len
    out_f = Wr.shape[0]
    assert Wr.shape == (out_f, cut_freq) and Wi.shape == (out_f, cut_freq)
    assert out_f <= out_len // 2 + 1, "freq_upsampler output exceeds rfft bins"

    # Forward rfft truncated to cut_freq:  X[k] = sum_n x[n] e^{-2 pi i k n / L}
    n = np.arange(input_len)[:, None]
    k = np.arange(cut_freq)[None, :]
    ang = 2.0 * np.pi * n * k / input_len
    Cf = np.cos(ang)                     # (L, F)  -> Re(X)
    Sf = -np.sin(ang)                    # (L, F)  -> Im(X)

    # Inverse rfft of an out_len-point signal restricted to the first out_f
    # (nonzero) bins.  Weight 1/N for DC & Nyquist, 2/N otherwise; imaginary
    # parts of DC/Nyquist are ignored, matching torch.fft.irfft.
    N = out_len
    kk = np.arange(out_f)[:, None]
    nn = np.arange(N)[None, :]
    ang_i = 2.0 * np.pi * kk * nn / N
    w = np.where((kk == 0) | (2 * kk == N), 1.0 / N, 2.0 / N)
    Cinv = w * np.cos(ang_i)             # (out_f, N)
    Sinv = -(w * np.sin(ang_i))          # (out_f, N)

    WrT, WiT = Wr.T, Wi.T                # (F, out_f)
    # (Xr + iXi)(Wr + iWi)^T -> Yr = Xr WrT - Xi WiT ; Yi = Xr WiT + Xi WrT
    # time domain: y = Yr @ Cinv + Yi @ Sinv, then * length_ratio.
    M = ((Cf @ WrT - Sf @ WiT) @ Cinv + (Cf @ WiT + Sf @ WrT) @ Sinv) * length_ratio
    b = (br @ Cinv + bi @ Sinv) * length_ratio

    # Zero-pad the output axis to a multiple of 128 for lane-dense stores.
    out_pad = ((N + 127) // 128) * 128
    if out_pad != N:
        M = np.pad(M, ((0, 0), (0, out_pad - N)))
        b = np.pad(b, (0, out_pad - N))

    return (jnp.asarray(M, dtype=weight_dtype),
            jnp.asarray(b.reshape(1, out_pad), dtype=jnp.float32))


# ------------------------------ spec helpers ---------------------------------
def _invariant_spec(block_shape):
    """BlockSpec for a grid-invariant operand: single-buffer it (a second buffer
    for a block whose index never changes is pure VMEM waste)."""
    idx = lambda i: (0, 0)
    if hasattr(pl, "Buffered"):
        try:
            return pl.BlockSpec(block_shape, idx, pipeline_mode=pl.Buffered(1))
        except TypeError:   # older jax without pipeline_mode kwarg
            pass
    return pl.BlockSpec(block_shape, idx)


def _pick_batch_tile(B, block_b):
    """Batch tile: <=block_b rows, multiple of 8, and >=2 grid steps whenever
    possible so a v7x megacore can shard the 'parallel' axis across its 2 TCs."""
    if B <= 8:
        return B
    tb = min(block_b, 8 * ((B + 15) // 16))   # ceil(B/2) rounded up to 8
    return max(8, min(tb, B))


# --------------------------------- wrapper -----------------------------------
@functools.partial(jax.jit, static_argnames=("out_len", "block_b", "out_dtype"))
def fits_forward(x, M, b, *, out_len, block_b=1024, out_dtype=jnp.bfloat16):
    """x: (B, input_len) f32/bf16;  M: (input_len, out_pad);  b: (1, out_pad) f32."""
    B, L = x.shape
    out_pad = M.shape[1]
    assert out_pad % 128 == 0 and out_pad >= out_len

    TB = _pick_batch_tile(B, block_b)
    grid = (pl.cdiv(B, TB),)

    # Double-buffered x/out tiles + single-buffered weights; raise the scoped
    # VMEM limit only if this footprint would overshoot the 32 MiB default.
    tile_bytes = (2 * TB * L * x.dtype.itemsize
                  + 2 * TB * out_pad * jnp.dtype(out_dtype).itemsize
                  + M.size * M.dtype.itemsize + b.size * 4)
    cp_kwargs = dict(dimension_semantics=("parallel",))    # batch rows independent
    if int(1.25 * tile_bytes) > (32 << 20):
        cp_kwargs["vmem_limit_bytes"] = int(1.25 * tile_bytes)

    kernel = functools.partial(fits_kernel, inv_n_minus_1=1.0 / float(L - 1))

    out = pl.pallas_call(
        kernel,
        out_shape=jax.ShapeDtypeStruct((B, out_pad), out_dtype),
        grid=grid,
        in_specs=[
            pl.BlockSpec((TB, L), lambda i: (i, 0)),        # x tile (pipelined)
            _invariant_spec((L, out_pad)),                  # fused weight (resident)
            _invariant_spec((1, out_pad)),                  # fused bias   (resident)
        ],
        out_specs=pl.BlockSpec((TB, out_pad), lambda i: (i, 0)),   # lane-dense
        compiler_params=pltpu.CompilerParams(**cp_kwargs),
    )(x, M, b)

    return out if out_pad == out_len else out[:, :out_len]


# --------------------------- pure-JAX reference ------------------------------
def fits_ref(x, W, b, *, cut_freq, out_len):
    x = x.astype(jnp.float32)
    mean = jnp.mean(x, axis=1, keepdims=True)
    xc = x - mean
    var = jnp.var(xc, axis=1, keepdims=True, ddof=1) + 1e-5
    xn = xc / jnp.sqrt(var)
    spec = jnp.fft.rfft(xn, axis=1)[:, :cut_freq]
    y_ = spec @ W.T + b
    full = jnp.zeros((x.shape[0], out_len // 2 + 1), dtype=y_.dtype)
    full = full.at[:, : y_.shape[1]].set(y_)
    low_xy = jnp.fft.irfft(full, n=out_len, axis=1) * (out_len / x.shape[1])
    return low_xy * jnp.sqrt(var) + mean


# --------------------------------- main ---------------------------------------
if __name__ == "__main__":
    B = 32
    input_len = 64
    out_len = 128          # even; already a multiple of 128 (no padding needed)
    cut_freq = 16
    out_f = int(cut_freq * out_len / input_len)   # 32

    key = jax.random.PRNGKey(0)
    kx, kwr, kwi, kbr, kbi = jax.random.split(key, 5)

    x = jax.random.normal(kx, (B, input_len), dtype=jnp.float32)

    # nn.Linear(cut_freq, out_f).to(torch.cfloat): complex weight/bias,
    # initialized deterministically (uniform +/- 1/sqrt(in_features)).
    bound = 1.0 / np.sqrt(cut_freq)
    Wr = jax.random.uniform(kwr, (out_f, cut_freq), jnp.float32, -bound, bound)
    Wi = jax.random.uniform(kwi, (out_f, cut_freq), jnp.float32, -bound, bound)
    br = jax.random.uniform(kbr, (out_f,), jnp.float32, -bound, bound)
    bi = jax.random.uniform(kbi, (out_f,), jnp.float32, -bound, bound)

    # Precompose once (cached outside the jitted forward).
    M, b_out = make_fits_weights(Wr, Wi, br, bi,
                                 input_len=input_len, out_len=out_len,
                                 cut_freq=cut_freq)

    out = fits_forward(x, M, b_out, out_len=out_len)
    out = jax.block_until_ready(out)

    # Sanity check against the FFT-based reference.  Kernel uses bf16 weights,
    # one bf16 MXU pass (f32 accumulation) and a bf16 output store, so the
    # tolerance is set to bf16-level accuracy.
    W = (Wr + 1j * Wi).astype(jnp.complex64)
    bc = (br + 1j * bi).astype(jnp.complex64)
    ref = jax.block_until_ready(fits_ref(x, W, bc, cut_freq=cut_freq, out_len=out_len))

    out_f32 = out.astype(jnp.float32)
    err_max = float(jnp.max(jnp.abs(out_f32 - ref)))
    err_rms = float(jnp.sqrt(jnp.mean((out_f32 - ref) ** 2)))
    assert out.shape == (B, out_len)
    assert out.dtype == jnp.bfloat16
    assert err_max < 8e-2 and err_rms < 2.5e-2, (
        f"error too large: max={err_max} rms={err_rms}")

    print("KERNEL_OK")
</pallas_src>

<mosaic_0001>
module attributes {stable_mosaic.version = 11 : i64} {
  func.func @fits_kernel(%arg0: i32, %arg1: memref<16x64xf32, #tpu.memory_space<vmem>>, %arg2: memref<64x128xbf16, #tpu.memory_space<vmem>>, %arg3: memref<1x128xf32, #tpu.memory_space<vmem>>, %arg4: memref<16x128xbf16, #tpu.memory_space<vmem>>) attributes {dimension_semantics = [#tpu.dimension_semantics<parallel>], iteration_bounds = array<i64: 2>, scalar_prefetch = 0 : i64, scratch_operands = 0 : i64, tpu.core_type = #tpu.core_type<tc>, window_params = [{transform_indices = @transform_0, window_bounds = array<i64: 16, 64>}, {pipeline_mode = #tpu.pipeline_mode<synchronous>, transform_indices = @transform_1, window_bounds = array<i64: 64, 128>}, {pipeline_mode = #tpu.pipeline_mode<synchronous>, transform_indices = @transform_2, window_bounds = array<i64: 1, 128>}, {transform_indices = @transform_3, window_bounds = array<i64: 16, 128>}]} {
    %c0 = arith.constant 0 : index
    %c0_0 = arith.constant 0 : index
    %0 = vector.load %arg1[%c0, %c0_0] : memref<16x64xf32, #tpu.memory_space<vmem>>, vector<16x64xf32>
    %cst = arith.constant dense<0.000000e+00> : vector<16xf32>
    %1 = vector.multi_reduction <add>, %0, %cst [1] : vector<16x64xf32> to vector<16xf32>
    %2 = vector.shape_cast %1 : vector<16xf32> to vector<16x1xf32>
    %cst_1 = arith.constant 6.400000e+01 : f32
    %3 = vector.broadcast %cst_1 : f32 to vector<16x1xf32>
    %4 = arith.divf %2, %3 : vector<16x1xf32>
    %5 = vector.broadcast %4 : vector<16x1xf32> to vector<16x64xf32>
    %6 = arith.subf %0, %5 : vector<16x64xf32>
    %7 = arith.mulf %6, %6 : vector<16x64xf32>
    %cst_2 = arith.constant dense<0.000000e+00> : vector<16xf32>
    %8 = vector.multi_reduction <add>, %7, %cst_2 [1] : vector<16x64xf32> to vector<16xf32>
    %9 = vector.shape_cast %8 : vector<16xf32> to vector<16x1xf32>
    %cst_3 = arith.constant 0.0158730168 : f32
    %10 = vector.broadcast %cst_3 : f32 to vector<16x1xf32>
    %11 = arith.mulf %9, %10 : vector<16x1xf32>
    %cst_4 = arith.constant 9.99999974E-6 : f32
    %12 = vector.broadcast %cst_4 : f32 to vector<16x1xf32>
    %13 = arith.addf %11, %12 : vector<16x1xf32>
    %14 = math.rsqrt %13 : vector<16x1xf32>
    %15 = arith.mulf %13, %14 : vector<16x1xf32>
    %16 = vector.broadcast %14 : vector<16x1xf32> to vector<16x64xf32>
    %17 = arith.mulf %6, %16 : vector<16x64xf32>
    %18 = arith.truncf %17 : vector<16x64xf32> to vector<16x64xbf16>
    %c0_5 = arith.constant 0 : index
    %c0_6 = arith.constant 0 : index
    %19 = vector.load %arg2[%c0_5, %c0_6] : memref<64x128xbf16, #tpu.memory_space<vmem>>, vector<64x128xbf16>
    %cst_7 = arith.constant dense<0.000000e+00> : vector<16x128xf32>
    %20 = tpu.matmul %18, %19, %cst_7 {dimension_numbers = #tpu.dot_dimension_numbers<[1], [0], [0], [1], [0, 0, 1, 1], [], []>} : vector<16x64xbf16>, vector<64x128xbf16>, vector<16x128xf32> -> vector<16x128xf32>
    %c0_8 = arith.constant 0 : index
    %c0_9 = arith.constant 0 : index
    %21 = vector.load %arg3[%c0_8, %c0_9] : memref<1x128xf32, #tpu.memory_space<vmem>>, vector<1x128xf32>
    %22 = vector.broadcast %21 : vector<1x128xf32> to vector<16x128xf32>
    %23 = arith.addf %20, %22 : vector<16x128xf32>
    %24 = vector.broadcast %15 : vector<16x1xf32> to vector<16x128xf32>
    %25 = arith.mulf %23, %24 : vector<16x128xf32>
    %26 = vector.broadcast %4 : vector<16x1xf32> to vector<16x128xf32>
    %27 = arith.addf %25, %26 : vector<16x128xf32>
    %28 = arith.truncf %27 : vector<16x128xf32> to vector<16x128xbf16>
    %c0_10 = arith.constant 0 : index
    %c0_11 = arith.constant 0 : index
    %29 = vector.load %arg4[%c0_10, %c0_11] : memref<16x128xbf16, #tpu.memory_space<vmem>>, vector<16x128xbf16>
    tpu.vector_store %arg4[%c0_10, %c0_11], %28 {strides = array<i32>} : memref<16x128xbf16, #tpu.memory_space<vmem>>, vector<16x128xbf16>,
    return
  }
  func.func @transform_0(%arg0: i32) -> (i32, i32) {
    %c0_i32 = arith.constant 0 : i32
    %c0_i32_0 = arith.constant 0 : i32
    return %arg0, %c0_i32 : i32, i32
  }
  func.func @transform_1(%arg0: i32) -> (i32, i32) {
    %c0_i32 = arith.constant 0 : i32
    %c0_i32_0 = arith.constant 0 : i32
    %c0_i32_1 = arith.constant 0 : i32
    return %c0_i32, %c0_i32_0 : i32, i32
  }
  func.func @transform_2(%arg0: i32) -> (i32, i32) {
    %c0_i32 = arith.constant 0 : i32
    %c0_i32_0 = arith.constant 0 : i32
    %c0_i32_1 = arith.constant 0 : i32
    return %c0_i32, %c0_i32_0 : i32, i32
  }
  func.func @transform_3(%arg0: i32) -> (i32, i32) {
    %c0_i32 = arith.constant 0 : i32
    %c0_i32_0 = arith.constant 0 : i32
    return %arg0, %c0_i32 : i32, i32
  }
}

</mosaic_0001>

<llo_original>
// kernel: fits_forward.1
$region0: #{fits_forward.1}
  #allocation0 [shape = 'u32[]', space=smem, size = 0x4, offset = 0x4, fixed_abs, tag = 'smem constant byte address 0x4 - core index']
  #allocation1 [shape = 'u32[144,128]{1,0:T(1,128)}', space=vmem, size = 0x12000, scoped, tag = 'internal scratch']
  %s0 = inlined_call_operand.hbm [shape: f32[32,64], index: 0, kind: input, shape index: {}]
  %s1 = inlined_call_operand.hbm [shape: bf16[64,128], index: 1, kind: input, shape index: {}]
  %s2 = inlined_call_operand.vmem [shape: f32[1,128], index: 2, kind: input, shape index: {}]
  %s3 = inlined_call_operand.hbm [shape: bf16[32,128], index: 3, kind: output, shape index: {}]
  %s4 = sld [smem:[#allocation0]]
  $region53: #{fits_forward.1} parent=0
    _
  %s6 = ssub.s32 1, %s4
  %s7 = scalar_select 0, %s6, %s4
  $region1: #{fits_forward.1} parent=0
    #allocation2 [shape = 'u8[16384]{0}', space=vmem, size = 0x4000, scoped, tag = 'input window, operand 0']
    #allocation3 [shape = 's32[2]{0}', space=sflag, size = 0x8, scoped, tag = 'scoped memory for fits_forward.1']
    #allocation4 [shape = 's32[2]{0}', space=sflag, size = 0x8, scoped, tag = 'scoped memory for fits_forward.1']
    #allocation5 [shape = 'u8[16384]{0}', space=vmem, size = 0x4000, scoped, tag = 'input window, operand 1, single buffered']
    #allocation6 [shape = 's32[1]{0}', space=sflag, size = 0x4, scoped, tag = 'scoped memory for fits_forward.1']
    #allocation7 [shape = 'u8[8192]{0}', space=vmem, size = 0x2000, scoped, tag = 'output window, operand 0']
    %8 = vsyncpa [#allocation3], 0
    %s9 = scalar_lea.sflag [#allocation3], 1
    %10 = vsyncpa %s9, 0
    %11 = vsyncpa [#allocation6], 0
    %12 = vsyncpa [#allocation4], 0
    %s13 = scalar_lea.sflag [#allocation4], 1
    %14 = vsyncpa %s13, 0
    loop: start=0, step=1, limit=4
    $region2: #{fits_forward.1} parent=1 // loop_pre_header
      _
    $region3: #{fits_forward.1} parent=1 // loop_header
      %s16 = sphi 0, %s20
      %p17 = scmp.ge.s32.totalorder %s16, 4
      %s26 = sphi 0, %s28
      %s29 = sphi 0, %s26
      %s30 = sphi 0, %s29
      %s46 = sphi 0, %s30
      %s50 = sphi 0, %s50
      %s52 = sphi 0, %s50
      %s53 = sphi 0, %s52
      %s67 = sphi 0, %s53
      %s71 = sphi 0, %s71
      %s73 = sphi 0, %s71
      %s74 = sphi 0, %s73
      %s88 = sphi 0, %s74
      %s94 = sphi 0, %s96
      %s97 = sphi 0, %s94
      %s98 = sphi 0, %s97
      %s114 = sphi 0, %s98
    $region4: #{fits_forward.1} parent=1 // loop_header_branch
      %19 = sbr.rel (%p17) target = $region8
    $region5: #{fits_forward.1} parent=1 // loop_body
      %s21 = ssub.s32 %s16, 1
      %s22 = ssub.s32 %s16, 2
      %s23 = sadd.s32 %s16, 1
      %s24 = ssub.s32 %s16, %s23
      %p25 = scmp.eq.s32.totalorder %s24, 0
      %s27 = sadd.s32 %s26, 1
      %s28 = scalar_select %p25, %s26, %s27
      %p31 = pneg %p25
      %p32 = scmp.eq.s32.totalorder %s16, 1
      %p33 = por %p31, %p32
      %p34 = scmp.ne.s32.totalorder %s26, %s29
      %p35 = scmp.eq.s32.totalorder %s16, 0
      %p36 = por %p34, %p35
      %p37 = scmp.ne.s32.totalorder %s26, %s29
      %p38 = scmp.eq.s32.totalorder %s21, 1
      %p39 = por %p37, %p38
      %p40 = scmp.ne.s32.totalorder %s29, %s30
      %p41 = scmp.eq.s32.totalorder %s21, 0
      %p42 = por %p40, %p41
      %p43 = scmp.ne.s32.totalorder %s29, %s30
      %p44 = scmp.eq.s32.totalorder %s22, 1
      %p45 = por %p43, %p44
      %p47 = scmp.ne.s32.totalorder %s30, %s46
      %p48 = scmp.eq.s32.totalorder %s22, 0
      %p49 = por %p47, %p48
      %s51 = sadd.s32 %s50, 1
      %p54 = scmp.eq.s32.totalorder %s16, 1
      %p55 = scmp.ne.s32.totalorder %s50, %s52
      %p56 = scmp.eq.s32.totalorder %s16, 0
      %p57 = por %p55, %p56
      %p58 = scmp.ne.s32.totalorder %s50, %s52
      %p59 = scmp.eq.s32.totalorder %s21, 1
      %p60 = por %p58, %p59
      %p61 = scmp.ne.s32.totalorder %s52, %s53
      %p62 = scmp.eq.s32.totalorder %s21, 0
      %p63 = por %p61, %p62
      %p64 = scmp.ne.s32.totalorder %s52, %s53
      %p65 = scmp.eq.s32.totalorder %s22, 1
      %p66 = por %p64, %p65
      %p68 = scmp.ne.s32.totalorder %s53, %s67
      %p69 = scmp.eq.s32.totalorder %s22, 0
      %p70 = por %p68, %p69
      %s72 = sadd.s32 %s71, 1
      %p75 = scmp.eq.s32.totalorder %s16, 1
      %p76 = scmp.ne.s32.totalorder %s71, %s73
      %p77 = scmp.eq.s32.totalorder %s16, 0
      %p78 = por %p76, %p77
      %p79 = scmp.ne.s32.totalorder %s71, %s73
      %p80 = scmp.eq.s32.totalorder %s21, 1
      %p81 = por %p79, %p80
      %p82 = scmp.ne.s32.totalorder %s73, %s74
      %p83 = scmp.eq.s32.totalorder %s21, 0
      %p84 = por %p82, %p83
      %p85 = scmp.ne.s32.totalorder %s73, %s74
      %p86 = scmp.eq.s32.totalorder %s22, 1
      %p87 = por %p85, %p86
      %p89 = scmp.ne.s32.totalorder %s74, %s88
      %p90 = scmp.eq.s32.totalorder %s22, 0
      %p91 = por %p89, %p90
      %s92 = ssub.s32 %s16, %s23
      %p93 = scmp.eq.s32.totalorder %s92, 0
      %s95 = sadd.s32 %s94, 1
      %s96 = scalar_select %p93, %s94, %s95
      %p99 = pneg %p93
      %p100 = scmp.eq.s32.totalorder %s16, 1
      %p101 = por %p99, %p100
      %p102 = scmp.ne.s32.totalorder %s94, %s97
      %p103 = scmp.eq.s32.totalorder %s16, 0
      %p104 = por %p102, %p103
      %p105 = scmp.ne.s32.totalorder %s94, %s97
      %p106 = scmp.eq.s32.totalorder %s21, 1
      %p107 = por %p105, %p106
      %p108 = scmp.ne.s32.totalorder %s97, %s98
      %p109 = scmp.eq.s32.totalorder %s21, 0
      %p110 = por %p108, %p109
      %p111 = scmp.ne.s32.totalorder %s97, %s98
      %p112 = scmp.eq.s32.totalorder %s22, 1
      %p113 = por %p111, %p112
      %p115 = scmp.ne.s32.totalorder %s98, %s114
      %p116 = scmp.eq.s32.totalorder %s22, 0
      %p117 = por %p115, %p116
      %p118 = scmp.le.s32.totalorder 1, %s16
      %p119 = scmp.lt.s32.totalorder %s16, 3
      %p120 = pnand %p118, %p119
      %p121 = pneg %p120
      // Predicated region
      $region9: #{fits_forward.1} parent=5 // pred_check
        _
      $region10: #{fits_forward.1} parent=5 // pred_check_branch
        %123 = sbr.rel (%p120) target = $region12
      $region11: #{fits_forward.1} parent=5 // pred_region
        %s124 = ssub.s32 %s16, 1
        // Predicated region
        $region13: #{fits_forward.1} parent=11 // pred_check
          %p125 = pneg %p63
        $region14: #{fits_forward.1} parent=11 // pred_check_branch
          %127 = sbr.rel (%p125) target = $region16
        $region15: #{fits_forward.1} parent=11 // pred_region
          %s129 = ssub.s32 512, 512
          %130 = vsyncadd [#allocation6], %s129
          %s131 = sshll.u32 [#allocation5], 4
          %s132 = int_to_ptr.vmem [resolvable:$true] %s131
          %137 = dma.hbm_to_vmem [thread:$0]  %s1, 512, %s132, [#allocation6], 64, 64, 4
        $region16: #{fits_forward.1} parent=11 // pred_fallthru
          _
        // Predicated region
        $region17: #{fits_forward.1} parent=11 // pred_check
          %p138 = pneg %p84
        $region18: #{fits_forward.1} parent=11 // pred_check_branch
          %140 = sbr.rel (%p138) target = $region20
        $region19: #{fits_forward.1} parent=11 // pred_region
          _
        $region20: #{fits_forward.1} parent=11 // pred_fallthru
          _
      $region12: #{fits_forward.1} parent=5 // pred_fallthru
        _
      %p141 = scmp.lt.s32.totalorder %s16, 2
      // Predicated region
      $region21: #{fits_forward.1} parent=5 // pred_check
        %p142 = pneg %p141
      $region22: #{fits_forward.1} parent=5 // pred_check_branch
        %144 = sbr.rel (%p142) target = $region24
      $region23: #{fits_forward.1} parent=5 // pred_region
        // Predicated region
        $region25: #{fits_forward.1} parent=23 // pred_check
          %p145 = pneg %p36
        $region26: #{fits_forward.1} parent=23 // pred_check_branch
          %147 = sbr.rel (%p145) target = $region28
        $region27: #{fits_forward.1} parent=23 // pred_region
          %s148 = sand.u32 %s26, 1
          %s149 = scalar_lea.sflag [#allocation3], %s148
          %s150 = sand.u32 %s26, 1
          %s151 = smul.addr %s150, 16
          %s152 = scalar_lea.vmem [#allocation2], %s151
          %s153 = smul.u32 2, %s16
          %s155 = ssub.s32 256, 256
          %156 = vsyncadd %s149, %s155
          %s157 = smul.addr %s153, 128
          %s158 = scalar_lea.hbm %s0, %s157
          %s159 = sshll.u32 %s152, 4
          %s160 = int_to_ptr.vmem [resolvable:$true] %s159
          %165 = dma.hbm_to_vmem [thread:$0]  %s158, 256, %s160, %s149, 128, 128, 8
        $region28: #{fits_forward.1} parent=23 // pred_fallthru
          _
      $region24: #{fits_forward.1} parent=5 // pred_fallthru
        _
      %p166 = scmp.le.s32.totalorder 1, %s16
      %p167 = scmp.lt.s32.totalorder %s16, 3
      %p168 = pnand %p166, %p167
      %p169 = pneg %p168
      // Predicated region
      $region29: #{fits_forward.1} parent=5 // pred_check
        _
      $region30: #{fits_forward.1} parent=5 // pred_check_branch
        %171 = sbr.rel (%p168) target = $region32
      $region31: #{fits_forward.1} parent=5 // pred_region
        %s172 = ssub.s32 %s16, 1
        %s173 = sand.u32 %s29, 1
        %s174 = scalar_lea.sflag [#allocation3], %s173
        %s175 = sand.u32 %s29, 1
        %s176 = smul.addr %s175, 16
        %s177 = scalar_lea.vmem [#allocation2], %s176
        // Predicated region
        $region33: #{fits_forward.1} parent=31 // pred_check
          %p178 = pneg %p42
        $region34: #{fits_forward.1} parent=31 // pred_check_branch
          %180 = sbr.rel (%p178) target = $region36
        $region35: #{fits_forward.1} parent=31 // pred_region
          %181 = dma.done %s174, 256
        $region36: #{fits_forward.1} parent=31 // pred_fallthru
          _
        // Predicated region
        $region37: #{fits_forward.1} parent=31 // pred_check
          %p182 = pneg %p63
        $region38: #{fits_forward.1} parent=31 // pred_check_branch
          %184 = sbr.rel (%p182) target = $region40
        $region39: #{fits_forward.1} parent=31 // pred_region
          %185 = dma.done [#allocation6], 512
        $region40: #{fits_forward.1} parent=31 // pred_fallthru
          _
        %s186 = sand.u32 %s29, 1
        %s187 = scalar_lea.sflag [#allocation3], %s186
        %s188 = sand.u32 %s29, 1
        %s189 = smul.addr %s188, 16
        %s190 = scalar_lea.vmem [#allocation2], %s189
        %p191 = pneg %p42
        %p192 = pneg %p39
        %p193 = pneg %p63
        %p194 = pneg %p60
        %p195 = pneg %p84
        %p196 = pneg %p81
        %p197 = pneg %p110
        %p198 = pneg %p107
        %s199 = sand.u32 %s97, 1
        %s200 = scalar_lea.sflag [#allocation4], %s199
        %s201 = sand.u32 %s97, 1
        %s202 = smul.addr %s201, 8
        %s203 = scalar_lea.vmem [#allocation7], %s202
        %s204 = smul.u32 2, %s21
        %s205 = smul.u32 2, %s21
        %v207 = vld [vmem:[%s177] sm:$0xff]
        %v208 = vld [vmem:[%s177 + $0x8] sm:$0xff]
        %vm209 = vcmask 523264
        %v210 = vsel %vm209, %v207, 0.0
        %211 = vadd.xlane.f32.xlu0 %v210
        %v212 = vpop.xlane.xlu0 %211
        %v213 = vsel %vm209, %v208, 0.0
        %214 = vadd.xlane.f32.xlu0 %v213
        %v215 = vpop.xlane.xlu0 %214
        %v216 = vrcp.pop 64.0
        %v217 = vmul.f32 %v212, %v216
        %v218 = vmul.f32 %v215, %v216
        %v219 = vsub.f32 %v207, %v217
        %v220 = vsub.f32 %v208, %v218
        %v221 = vmul.f32 %v219, %v219
        %v222 = vmul.f32 %v220, %v220
        %v223 = vsel %vm209, %v221, 0.0
        %224 = vadd.xlane.f32.xlu0 %v223
        %v225 = vpop.xlane.xlu0 %224
        %v226 = vsel %vm209, %v222, 0.0
        %227 = vadd.xlane.f32.xlu0 %v226
        %v228 = vpop.xlane.xlu0 %227
        %v229 = vmul.f32 %v225, 0.015873017
        %v230 = vmul.f32 %v228, 0.015873017
        %v231 = vadd.f32 %v229, 1e-05
        %v232 = vadd.f32 %v230, 1e-05
        %v233 = vrsqrt.pop %v231
        %v234 = vrsqrt.pop %v232
        %v235 = vmul.f32 %v231, %v233
        %v236 = vmul.f32 %v232, %v234
        %v237 = vmul.f32 %v219, %v233
        %v238 = vmul.f32 %v220, %v234
        %v239 = vpack.c.bf16 %v238, %v237
        %v240 = vld [vmem:[#allocation5] sm:$0xf]
        %v241 = vld [vmem:[#allocation5 + $0x4] sm:$0xf]
        %v242 = vld [vmem:[#allocation5 + $0x8] sm:$0xf]
        %v243 = vld [vmem:[#allocation5 + $0xc] sm:$0xf]
        %v244 = vld [vmem:[#allocation5 + $0x10] sm:$0xf]
        %v245 = vld [vmem:[#allocation5 + $0x14] sm:$0xf]
        %v246 = vld [vmem:[#allocation5 + $0x18] sm:$0xf]
        %v247 = vld [vmem:[#allocation5 + $0x1c] sm:$0xf]
        %v248 = vld [vmem:[%s2] sm:$0x1]
        %v250 = vlaneseq
        %v251 = vshrl.u32 %v250, 7
        %v252 = vsub.s32 0, %v251
        %v253 = vrot.slane %v248, %v252
        %v263 = vunpack.c.l.b16 %v240
        %v264 = vunpack.c.l.b16 %v241
        %v265 = vunpack.c.l.b16 %v242
        %v266 = vunpack.c.l.b16 %v243
        %v267 = vunpack.c.l.b16 %v244
        %v268 = vunpack.c.l.b16 %v245
        %v269 = vunpack.c.l.b16 %v246
        %v270 = vunpack.c.l.b16 %v247
        %v271 = vpack.c.b16 %v264, %v263
        %v272 = vpack.c.b16 %v266, %v265
        %v273 = vpack.c.b16 %v268, %v267
        %v274 = vpack.c.b16 %v270, %v269
        %v280 = vsel %vm209, %v239, 0
        %282 = vmatprep.subr.bf16.mxu0 0
        %283 = vmatpush1.bf16.msra.mxu0 %v271
        %284 = vmatprep.subr.bf16.mxu0 0
        %285 = vmatpush1.bf16.msra.mxu0 %v272
        %286 = vmatprep.subr.bf16.mxu0 0
        %287 = vmatpush1.bf16.msra.mxu0 %v273
        %288 = vmatprep.subr.bf16.mxu0 0
        %289 = vmatpush1.bf16.msra.mxu0 %v274
        %290 = vmatprep.subr.bf16.mxu0 0
        %291 = vmatpush1.bf16.msra.mxu0 0
        %292 = vmatprep.subr.bf16.mxu0 0
        %293 = vmatpush1.bf16.msra.mxu0 0
        %294 = vmatprep.subr.bf16.mxu0 0
        %295 = vmatpush1.bf16.msra.mxu0 0
        %296 = vmatprep.subr.bf16.mxu0 0
        %297 = vmatpush1.bf16.msra.mxu0 0
        %298 = vmatprep.subr.bf16.mxu0 0
        %299 = vmatpush1.bf16.msra.mxu0 0
        %300 = vmatprep.subr.bf16.mxu0 0
        %301 = vmatpush1.bf16.msra.mxu0 0
        %302 = vmatprep.subr.bf16.mxu0 0
        %303 = vmatpush1.bf16.msra.mxu0 0
        %304 = vmatprep.subr.bf16.mxu0 0
        %305 = vmatpush1.bf16.msra.mxu0 0
        %306 = vmatprep.subr.bf16.mxu0 0
        %307 = vmatpush1.bf16.msra.mxu0 0
        %308 = vmatprep.subr.bf16.mxu0 0
        %309 = vmatpush1.bf16.msra.mxu0 0
        %310 = vmatprep.subr.bf16.mxu0 0
        %311 = vmatpush1.bf16.msra.mxu0 0
        %312 = vmatprep.subr.bf16.mxu0 0
        %313 = vmatpush1.bf16.msra.mxu0 0
        %314 = vmatprep.mubr.bf16.mxu0 0
        %315 = vmatmul.mubr.bf16.gmra.mrb[0].mxu0 %v280
        %v316 = vpop.f32.mrb[0].mxu0
        %v317 = vadd.f32 %v253, %v316
        %v318 = vpop.f32.mrb[0].mxu0
        %v319 = vpop.f32.mrb[0].mxu0
        %v320 = vadd.f32 %v253, %v319
        %v321 = vpop.f32.mrb[0].mxu0
        %322 = vdwg.mxu0
        %v323 = vmul.f32 %v317, %v235
        %v324 = vmul.f32 %v320, %v236
        %v325 = vadd.f32 %v323, %v217
        %v326 = vadd.f32 %v324, %v218
        %v327 = vpack.c.bf16 %v326, %v325
        %v329 = vunpack.c.l.b16 %v327
        %v330 = vunpack.c.h.b16 %v327
        %v331 = vpack.c.b16 %v329, %v329
        %v332 = vpack.c.b16 %v330, %v330
        %335 = vst [vmem:[%s203] sm:$0xf] %v331
        %336 = vst [vmem:[%s203 + $0x4] sm:$0xf] %v332
        %s337 = sand.u32 %s97, 1
        %s338 = scalar_lea.sflag [#allocation4], %s337
        %s339 = sand.u32 %s97, 1
        %s340 = smul.addr %s339, 8
        %s341 = scalar_lea.vmem [#allocation7], %s340
        // Predicated region
        $region41: #{fits_forward.1} parent=31 // pred_check
          %p342 = pneg %p107
        $region42: #{fits_forward.1} parent=31 // pred_check_branch
          %344 = sbr.rel (%p342) target = $region44
        $region43: #{fits_forward.1} parent=31 // pred_region
          %s345 = smul.u32 2, %s21
          %s347 = ssub.s32 128, 128
          %348 = vsyncadd %s338, %s347
          %s349 = smul.addr %s345, 64
          %s350 = scalar_lea.hbm %s3, %s349
          %s351 = sshll.u32 %s341, 4
          %s352 = int_to_ptr.vmem [resolvable:$true] %s351
          %357 = dma.vmem_to_hbm [thread:$0]  %s352, 128, %s350, %s338, 64, 64, 4
        $region44: #{fits_forward.1} parent=31 // pred_fallthru
          _
      $region32: #{fits_forward.1} parent=5 // pred_fallthru
        _
      %p358 = scmp.le.s32.totalorder 2, %s16
      // Predicated region
      $region45: #{fits_forward.1} parent=5 // pred_check
        %p359 = pneg %p358
      $region46: #{fits_forward.1} parent=5 // pred_check_branch
        %361 = sbr.rel (%p359) target = $region48
      $region47: #{fits_forward.1} parent=5 // pred_region
        %s362 = ssub.s32 %s16, 2
        // Predicated region
        $region49: #{fits_forward.1} parent=47 // pred_check
          %p363 = pneg %p113
        $region50: #{fits_forward.1} parent=47 // pred_check_branch
          %365 = sbr.rel (%p363) target = $region52
        $region51: #{fits_forward.1} parent=47 // pred_region
          %s366 = sand.u32 %s98, 1
          %s367 = scalar_lea.sflag [#allocation4], %s366
          %s368 = sand.u32 %s98, 1
          %s369 = smul.addr %s368, 8
          %s370 = scalar_lea.vmem [#allocation7], %s369
          %371 = dma.done %s367, 128
        $region52: #{fits_forward.1} parent=47 // pred_fallthru
          _
      $region48: #{fits_forward.1} parent=5 // pred_fallthru
        _
    $region6: #{fits_forward.1} parent=1 // loop_footer
      %s20 = sadd.s32 1, %s16
    $region7: #{fits_forward.1} parent=1 // loop_footer_branch
      %15 = sbr.rel target = $region3
    $region8: #{fits_forward.1} parent=1 // loop_exit
      _
    %372 = vsyncpa [#allocation3], 1
    %s373 = scalar_lea.sflag [#allocation3], 1
    %374 = vsyncpa %s373, 1
    %375 = vsyncpa [#allocation6], 1
    %376 = vsyncpa [#allocation4], 1
    %s377 = scalar_lea.sflag [#allocation4], 1
    %378 = vsyncpa %s377, 1

</llo_original>
